<compile_context>
chip_gen: v7x
topology: tpu7x:2x2x1
jax: 0.10.0
libtpu: 0.0.40
codegen_flags: <defaults>
</compile_context>

<pallas_src>
import functools

import jax
import jax.numpy as jnp
from jax.experimental import pallas as pl
from jax.experimental.pallas import tpu as pltpu


def _vmem_resident_spec():
    # Whole array resident in VMEM for the kernel's lifetime (no pipelining).
    return pl.BlockSpec(memory_space=pltpu.MemorySpace.VMEM)


def _mlp_kernel(x_ref, w1_ref, b1_ref, w2_ref, b2_ref, o_ref):
    # First linear: (tile_m, in) @ (in, mid) + (1, mid); f32 MXU accumulation.
    h = jnp.dot(x_ref[...], w1_ref[...], preferred_element_type=jnp.float32)
    h = h + b1_ref[...].astype(jnp.float32)
    # ReLU (use_relu=True in the reference module); kept in f32.
    h = jnp.maximum(h, 0.0)
    # TODO(synk): training-mode dropout (dropout_r > 0) is not implemented;
    # eval-mode dropout is the identity, which is what we reproduce here.
    # TODO(synk): for very large mid_size (>= ~2048) the hidden dim should be
    # tiled with an "arbitrary" grid axis + f32 accumulator scratch to bound
    # the (tile_m, mid) f32 intermediate; not needed at these sizes.
    # Second linear: (tile_m, mid) @ (mid, out) + (1, out).
    y = jnp.dot(h.astype(w2_ref.dtype), w2_ref[...],
                preferred_element_type=jnp.float32)
    y = y + b2_ref[...].astype(jnp.float32)
    o_ref[...] = y.astype(o_ref.dtype)


def _choose_tile_m(m, dtype, max_tile=512):
    """Large, sublane-aligned row tile: 8-multiple (f32) / 16-multiple (bf16)."""
    sublane = 16 if jnp.dtype(dtype).itemsize == 2 else 8
    round_up = lambda v, k: ((v + k - 1) // k) * k
    if m <= max_tile:
        return round_up(max(m, 1), sublane)  # single tile, minimal padding
    # Prefer a large tile that divides M exactly to avoid padding activations.
    for cand in (512, 448, 384, 320, 256, 192, 128):
        if cand % sublane == 0 and m % cand == 0:
            return cand
    return max_tile


@functools.partial(jax.jit, static_argnames=("max_tile_m",))
def mlp_forward(x, w1, b1, w2, b2, *, max_tile_m=512):
    """x: (..., in_size). w1: (in, mid), b1: (mid,), w2: (mid, out), b2: (out,)."""
    in_size = x.shape[-1]
    mid_size = w1.shape[1]
    out_size = w2.shape[1]

    lead_shape = x.shape[:-1]
    x2d = x.reshape(-1, in_size)
    m = x2d.shape[0]

    tile_m = _choose_tile_m(m, x.dtype, max_tile=max_tile_m)
    m_pad = pl.cdiv(m, tile_m) * tile_m
    if m_pad != m:
        # Only materialize a padded copy when strictly needed.
        x2d = jnp.pad(x2d, ((0, m_pad - m), (0, 0)))

    b1_2d = b1.reshape(1, mid_size)
    b2_2d = b2.reshape(1, out_size)

    grid = (m_pad // tile_m,)

    x_item = jnp.dtype(x.dtype).itemsize
    w_item = jnp.dtype(w1.dtype).itemsize
    weight_bytes = (in_size * mid_size + mid_size
                    + mid_size * out_size + out_size) * w_item
    # x/out tiles are double-buffered by the pipeline; h/y intermediates are f32.
    tile_bytes = (2 * tile_m * in_size * x_item
                  + 2 * tile_m * out_size * x_item
                  + tile_m * (mid_size + out_size) * 4)
    vmem_limit = int(min(max(2 * (weight_bytes + tile_bytes), 32 * 2**20),
                         64 * 2**20))

    flops = 2 * m_pad * (in_size * mid_size + mid_size * out_size)
    bytes_accessed = int(m_pad * (in_size + out_size) * x_item + weight_bytes)

    out2d = pl.pallas_call(
        _mlp_kernel,
        out_shape=jax.ShapeDtypeStruct((m_pad, out_size), x.dtype),
        grid_spec=pltpu.PrefetchScalarGridSpec(
            num_scalar_prefetch=0,
            grid=grid,
            in_specs=[
                pl.BlockSpec((tile_m, in_size), lambda i: (i, 0)),  # x rows
                _vmem_resident_spec(),   # w1 (grid-constant, single VMEM copy)
                _vmem_resident_spec(),   # b1
                _vmem_resident_spec(),   # w2
                _vmem_resident_spec(),   # b2
            ],
            out_specs=pl.BlockSpec((tile_m, out_size), lambda i: (i, 0)),
        ),
        compiler_params=pltpu.CompilerParams(
            dimension_semantics=("parallel",),
            vmem_limit_bytes=vmem_limit),
        cost_estimate=pl.CostEstimate(
            flops=flops, transcendentals=0, bytes_accessed=bytes_accessed),
    )(x2d, w1, b1_2d, w2, b2_2d)

    out2d = out2d[:m]
    return out2d.reshape(*lead_shape, out_size)


def init_mlp_params(key, in_size, mid_size, out_size, dtype=jnp.float32):
    """Deterministic init mimicking nn.Linear's uniform(-1/sqrt(fan_in), ...)."""
    k1, k2, k3, k4 = jax.random.split(key, 4)
    bound1 = 1.0 / (in_size ** 0.5)
    bound2 = 1.0 / (mid_size ** 0.5)
    # Stored transposed relative to PyTorch: (in, out) so kernel does x @ W.
    w1 = jax.random.uniform(k1, (in_size, mid_size), dtype, -bound1, bound1)
    b1 = jax.random.uniform(k2, (mid_size,), dtype, -bound1, bound1)
    w2 = jax.random.uniform(k3, (mid_size, out_size), dtype, -bound2, bound2)
    b2 = jax.random.uniform(k4, (out_size,), dtype, -bound2, bound2)
    return w1, b1, w2, b2


def mlp_reference(x, w1, b1, w2, b2):
    h = jnp.maximum(x @ w1 + b1, 0.0)
    return h @ w2 + b2


if __name__ == "__main__":
    key = jax.random.PRNGKey(0)
    kx, kp = jax.random.split(key)

    # Small demo shapes; feature dims are 128-multiples so matmul K/N and the
    # output store path are lane-dense.
    batch, seq = 2, 8
    in_size, mid_size, out_size = 128, 256, 128

    x = jax.random.normal(kx, (batch, seq, in_size), jnp.float32)
    w1, b1, w2, b2 = init_mlp_params(kp, in_size, mid_size, out_size)

    out = mlp_forward(x, w1, b1, w2, b2)
    out = jax.block_until_ready(out)

    ref = mlp_reference(x, w1, b1, w2, b2)
    assert out.shape == (batch, seq, out_size), out.shape
    # Tolerance covers minor MXU accumulation-order differences vs. XLA.
    assert jnp.allclose(out, ref, atol=1e-3, rtol=1e-3), "mismatch vs reference"

    print("KERNEL_OK")
</pallas_src>

<mosaic_0001>
module attributes {stable_mosaic.version = 11 : i64} {
  func.func @_mlp_kernel(%arg0: i32, %arg1: memref<16x128xf32, #tpu.memory_space<vmem>>, %arg2: memref<128x256xf32, #tpu.memory_space<vmem>>, %arg3: memref<1x256xf32, #tpu.memory_space<vmem>>, %arg4: memref<256x128xf32, #tpu.memory_space<vmem>>, %arg5: memref<1x128xf32, #tpu.memory_space<vmem>>, %arg6: memref<16x128xf32, #tpu.memory_space<vmem>>) attributes {dimension_semantics = [#tpu.dimension_semantics<parallel>], iteration_bounds = array<i64: 1>, scalar_prefetch = 0 : i64, scratch_operands = 0 : i64, tpu.core_type = #tpu.core_type<tc>, window_params = [{transform_indices = @transform_0, window_bounds = array<i64: 16, 128>}, {pipeline_mode = #tpu.pipeline_mode<synchronous>, transform_indices = @transform_1, window_bounds = array<i64: 128, 256>}, {pipeline_mode = #tpu.pipeline_mode<synchronous>, transform_indices = @transform_2, window_bounds = array<i64: 1, 256>}, {pipeline_mode = #tpu.pipeline_mode<synchronous>, transform_indices = @transform_3, window_bounds = array<i64: 256, 128>}, {pipeline_mode = #tpu.pipeline_mode<synchronous>, transform_indices = @transform_4, window_bounds = array<i64: 1, 128>}, {transform_indices = @transform_5, window_bounds = array<i64: 16, 128>}]} {
    %c0 = arith.constant 0 : index
    %c0_0 = arith.constant 0 : index
    %0 = vector.load %arg1[%c0, %c0_0] : memref<16x128xf32, #tpu.memory_space<vmem>>, vector<16x128xf32>
    %c0_1 = arith.constant 0 : index
    %c0_2 = arith.constant 0 : index
    %1 = vector.load %arg2[%c0_1, %c0_2] : memref<128x256xf32, #tpu.memory_space<vmem>>, vector<128x256xf32>
    %cst = arith.constant dense<0.000000e+00> : vector<16x256xf32>
    %2 = tpu.matmul %0, %1, %cst {dimension_numbers = #tpu.dot_dimension_numbers<[1], [0], [0], [1], [0, 0, 1, 1], [], []>} : vector<16x128xf32>, vector<128x256xf32>, vector<16x256xf32> -> vector<16x256xf32>
    %c0_3 = arith.constant 0 : index
    %c0_4 = arith.constant 0 : index
    %3 = vector.load %arg3[%c0_3, %c0_4] : memref<1x256xf32, #tpu.memory_space<vmem>>, vector<1x256xf32>
    %4 = vector.broadcast %3 : vector<1x256xf32> to vector<16x256xf32>
    %5 = arith.addf %2, %4 : vector<16x256xf32>
    %cst_5 = arith.constant 0.000000e+00 : f32
    %6 = vector.broadcast %cst_5 : f32 to vector<16x256xf32>
    %7 = arith.maximumf %5, %6 : vector<16x256xf32>
    %c0_6 = arith.constant 0 : index
    %c0_7 = arith.constant 0 : index
    %8 = vector.load %arg4[%c0_6, %c0_7] : memref<256x128xf32, #tpu.memory_space<vmem>>, vector<256x128xf32>
    %cst_8 = arith.constant dense<0.000000e+00> : vector<16x128xf32>
    %9 = tpu.matmul %7, %8, %cst_8 {dimension_numbers = #tpu.dot_dimension_numbers<[1], [0], [0], [1], [0, 0, 1, 1], [], []>} : vector<16x256xf32>, vector<256x128xf32>, vector<16x128xf32> -> vector<16x128xf32>
    %c0_9 = arith.constant 0 : index
    %c0_10 = arith.constant 0 : index
    %10 = vector.load %arg5[%c0_9, %c0_10] : memref<1x128xf32, #tpu.memory_space<vmem>>, vector<1x128xf32>
    %11 = vector.broadcast %10 : vector<1x128xf32> to vector<16x128xf32>
    %12 = arith.addf %9, %11 : vector<16x128xf32>
    %c0_11 = arith.constant 0 : index
    %c0_12 = arith.constant 0 : index
    %13 = vector.load %arg6[%c0_11, %c0_12] : memref<16x128xf32, #tpu.memory_space<vmem>>, vector<16x128xf32>
    tpu.vector_store %arg6[%c0_11, %c0_12], %12 {strides = array<i32>} : memref<16x128xf32, #tpu.memory_space<vmem>>, vector<16x128xf32>,
    return
  }
  func.func @transform_0(%arg0: i32) -> (i32, i32) {
    %c0_i32 = arith.constant 0 : i32
    %c0_i32_0 = arith.constant 0 : i32
    return %arg0, %c0_i32 : i32, i32
  }
  func.func @transform_1(%arg0: i32) -> (i32, i32) {
    %c0_i32 = arith.constant 0 : i32
    %c0_i32_0 = arith.constant 0 : i32
    %c0_i32_1 = arith.constant 0 : i32
    return %c0_i32, %c0_i32_0 : i32, i32
  }
  func.func @transform_2(%arg0: i32) -> (i32, i32) {
    %c0_i32 = arith.constant 0 : i32
    %c0_i32_0 = arith.constant 0 : i32
    %c0_i32_1 = arith.constant 0 : i32
    return %c0_i32, %c0_i32_0 : i32, i32
  }
  func.func @transform_3(%arg0: i32) -> (i32, i32) {
    %c0_i32 = arith.constant 0 : i32
    %c0_i32_0 = arith.constant 0 : i32
    %c0_i32_1 = arith.constant 0 : i32
    return %c0_i32, %c0_i32_0 : i32, i32
  }
  func.func @transform_4(%arg0: i32) -> (i32, i32) {
    %c0_i32 = arith.constant 0 : i32
    %c0_i32_0 = arith.constant 0 : i32
    %c0_i32_1 = arith.constant 0 : i32
    return %c0_i32, %c0_i32_0 : i32, i32
  }
  func.func @transform_5(%arg0: i32) -> (i32, i32) {
    %c0_i32 = arith.constant 0 : i32
    %c0_i32_0 = arith.constant 0 : i32
    return %arg0, %c0_i32 : i32, i32
  }
}

</mosaic_0001>

<llo_original>
// kernel: mlp_forward.1
$region0: #{mlp_forward.1}
  #allocation0 [shape = 'u32[]', space=smem, size = 0x4, offset = 0x4, fixed_abs, tag = 'smem constant byte address 0x4 - core index']
  #allocation1 [shape = 'u32[144,128]{1,0:T(1,128)}', space=vmem, size = 0x12000, scoped, tag = 'internal scratch']
  %s0 = inlined_call_operand.hbm [shape: f32[16,128], index: 0, kind: input, shape index: {}]
  %s1 = inlined_call_operand.hbm [shape: f32[128,256], index: 1, kind: input, shape index: {}]
  %s2 = inlined_call_operand.vmem [shape: f32[1,256], index: 2, kind: input, shape index: {}]
  %s3 = inlined_call_operand.hbm [shape: f32[256,128], index: 3, kind: input, shape index: {}]
  %s4 = inlined_call_operand.vmem [shape: f32[1,128], index: 4, kind: input, shape index: {}]
  %s5 = inlined_call_operand.hbm [shape: f32[16,128], index: 5, kind: output, shape index: {}]
  %s6 = sld [smem:[#allocation0]]
  $region42: #{mlp_forward.1} parent=0
    _
  %s8 = ssub.s32 1, %s6
  %s9 = scalar_select 0, %s8, %s6
  $region1: #{mlp_forward.1} parent=0
    #allocation2 [shape = 'u8[8192]{0}', space=vmem, size = 0x2000, scoped, tag = 'input window, operand 0, single buffered']
    #allocation3 [shape = 's32[1]{0}', space=sflag, size = 0x4, scoped, tag = 'scoped memory for mlp_forward.1']
    #allocation4 [shape = 's32[1]{0}', space=sflag, size = 0x4, scoped, tag = 'scoped memory for mlp_forward.1']
    #allocation5 [shape = 'u8[131072]{0}', space=vmem, size = 0x20000, scoped, tag = 'input window, operand 1, single buffered']
    #allocation6 [shape = 's32[1]{0}', space=sflag, size = 0x4, scoped, tag = 'scoped memory for mlp_forward.1']
    #allocation7 [shape = 'u8[131072]{0}', space=vmem, size = 0x20000, scoped, tag = 'input window, operand 3, single buffered']
    #allocation8 [shape = 'u8[8192]{0}', space=vmem, size = 0x2000, scoped, tag = 'output window, operand 0, single buffered']
    %10 = vsyncpa [#allocation3], 0
    %11 = vsyncpa [#allocation6], 0
    %12 = vsyncpa [#allocation4], 0
    // Predicated region
    $region2: #{mlp_forward.1} parent=1 // pred_check
      _
    $region3: #{mlp_forward.1} parent=1 // pred_check_branch
      %14 = sbr.rel (0) target = $region5
    $region4: #{mlp_forward.1} parent=1 // pred_region
      %s16 = ssub.s32 256, 256
      %17 = vsyncadd [#allocation3], %s16
      %s18 = sshll.u32 [#allocation2], 4
      %s19 = int_to_ptr.vmem [resolvable:$true] %s18
      %24 = dma.hbm_to_vmem [thread:$0]  %s0, 256, %s19, [#allocation3], 128, 128, 8
    $region5: #{mlp_forward.1} parent=1 // pred_fallthru
      _
    // Predicated region
    $region6: #{mlp_forward.1} parent=1 // pred_check
      _
    $region7: #{mlp_forward.1} parent=1 // pred_check_branch
      %26 = sbr.rel (0) target = $region9
    $region8: #{mlp_forward.1} parent=1 // pred_region
      %s28 = ssub.s32 4096, 4096
      %29 = vsyncadd [#allocation6], %s28
      %s30 = sshll.u32 [#allocation5], 4
      %s31 = int_to_ptr.vmem [resolvable:$true] %s30
      %36 = dma.hbm_to_vmem [thread:$0]  %s1, 4096, %s31, [#allocation6], 256, 256, 16
    $region9: #{mlp_forward.1} parent=1 // pred_fallthru
      _
    // Predicated region
    $region10: #{mlp_forward.1} parent=1 // pred_check
      _
    $region11: #{mlp_forward.1} parent=1 // pred_check_branch
      %38 = sbr.rel (0) target = $region13
    $region12: #{mlp_forward.1} parent=1 // pred_region
      _
    $region13: #{mlp_forward.1} parent=1 // pred_fallthru
      _
    // Predicated region
    $region14: #{mlp_forward.1} parent=1 // pred_check
      _
    $region15: #{mlp_forward.1} parent=1 // pred_check_branch
      %40 = sbr.rel (0) target = $region17
    $region16: #{mlp_forward.1} parent=1 // pred_region
      %s42 = ssub.s32 4096, 4096
      %43 = vsyncadd [#allocation6], %s42
      %s44 = sshll.u32 [#allocation7], 4
      %s45 = int_to_ptr.vmem [resolvable:$true] %s44
      %50 = dma.hbm_to_vmem [thread:$0]  %s3, 4096, %s45, [#allocation6], 128, 128, 8
    $region17: #{mlp_forward.1} parent=1 // pred_fallthru
      _
    // Predicated region
    $region18: #{mlp_forward.1} parent=1 // pred_check
      _
    $region19: #{mlp_forward.1} parent=1 // pred_check_branch
      %52 = sbr.rel (0) target = $region21
    $region20: #{mlp_forward.1} parent=1 // pred_region
      _
    $region21: #{mlp_forward.1} parent=1 // pred_fallthru
      _
    // Predicated region
    $region22: #{mlp_forward.1} parent=1 // pred_check
      _
    $region23: #{mlp_forward.1} parent=1 // pred_check_branch
      %54 = sbr.rel (0) target = $region25
    $region24: #{mlp_forward.1} parent=1 // pred_region
      %55 = dma.done [#allocation3], 256
    $region25: #{mlp_forward.1} parent=1 // pred_fallthru
      _
    // Predicated region
    $region26: #{mlp_forward.1} parent=1 // pred_check
      _
    $region27: #{mlp_forward.1} parent=1 // pred_check_branch
      %57 = sbr.rel (0) target = $region29
    $region28: #{mlp_forward.1} parent=1 // pred_region
      %58 = dma.done [#allocation6], 4096
    $region29: #{mlp_forward.1} parent=1 // pred_fallthru
      _
    // Predicated region
    $region30: #{mlp_forward.1} parent=1 // pred_check
      _
    $region31: #{mlp_forward.1} parent=1 // pred_check_branch
      %60 = sbr.rel (0) target = $region33
    $region32: #{mlp_forward.1} parent=1 // pred_region
      %61 = dma.done [#allocation6], 4096
    $region33: #{mlp_forward.1} parent=1 // pred_fallthru
      _
    %v62 = vld [vmem:[#allocation2] sm:$0xff]
    %v63 = vld [vmem:[#allocation2 + $0x8] sm:$0xff]
    %v64 = vld [vmem:[#allocation5] sm:$0xff]
    %v65 = vld [vmem:[#allocation5 + $0x8] sm:$0xff]
    %v66 = vld [vmem:[#allocation5 + $0x10] sm:$0xff]
    %v67 = vld [vmem:[#allocation5 + $0x18] sm:$0xff]
    %v68 = vld [vmem:[#allocation5 + $0x20] sm:$0xff]
    %v69 = vld [vmem:[#allocation5 + $0x28] sm:$0xff]
    %v70 = vld [vmem:[#allocation5 + $0x30] sm:$0xff]
    %v71 = vld [vmem:[#allocation5 + $0x38] sm:$0xff]
    %v72 = vld [vmem:[#allocation5 + $0x40] sm:$0xff]
    %v73 = vld [vmem:[#allocation5 + $0x48] sm:$0xff]
    %v74 = vld [vmem:[#allocation5 + $0x50] sm:$0xff]
    %v75 = vld [vmem:[#allocation5 + $0x58] sm:$0xff]
    %v76 = vld [vmem:[#allocation5 + $0x60] sm:$0xff]
    %v77 = vld [vmem:[#allocation5 + $0x68] sm:$0xff]
    %v78 = vld [vmem:[#allocation5 + $0x70] sm:$0xff]
    %v79 = vld [vmem:[#allocation5 + $0x78] sm:$0xff]
    %v80 = vld [vmem:[#allocation5 + $0x80] sm:$0xff]
    %v81 = vld [vmem:[#allocation5 + $0x88] sm:$0xff]
    %v82 = vld [vmem:[#allocation5 + $0x90] sm:$0xff]
    %v83 = vld [vmem:[#allocation5 + $0x98] sm:$0xff]
    %v84 = vld [vmem:[#allocation5 + $0xa0] sm:$0xff]
    %v85 = vld [vmem:[#allocation5 + $0xa8] sm:$0xff]
    %v86 = vld [vmem:[#allocation5 + $0xb0] sm:$0xff]
    %v87 = vld [vmem:[#allocation5 + $0xb8] sm:$0xff]
    %v88 = vld [vmem:[#allocation5 + $0xc0] sm:$0xff]
    %v89 = vld [vmem:[#allocation5 + $0xc8] sm:$0xff]
    %v90 = vld [vmem:[#allocation5 + $0xd0] sm:$0xff]
    %v91 = vld [vmem:[#allocation5 + $0xd8] sm:$0xff]
    %v92 = vld [vmem:[#allocation5 + $0xe0] sm:$0xff]
    %v93 = vld [vmem:[#allocation5 + $0xe8] sm:$0xff]
    %v94 = vld [vmem:[#allocation5 + $0xf0] sm:$0xff]
    %v95 = vld [vmem:[#allocation5 + $0xf8] sm:$0xff]
    %v96 = vld [vmem:[%s2] sm:$0x3]
    %v98 = vlaneseq
    %v99 = vshrl.u32 %v98, 7
    %v100 = vsub.s32 0, %v99
    %v101 = vrot.slane %v96, %v100
    %v102 = vlaneseq
    %v103 = vshrl.u32 %v102, 7
    %v104 = vsub.s32 1, %v103
    %v105 = vrot.slane %v96, %v104
    %108 = vmatprep.subr.mxu0 %v65
    %109 = vmatpush1.msra.mxu0 %v64
    %110 = vmatprep.subr.mxu0 %v67
    %111 = vmatpush1.msra.mxu0 %v66
    %112 = vmatprep.subr.mxu0 %v69
    %113 = vmatpush1.msra.mxu0 %v68
    %114 = vmatprep.subr.mxu0 %v71
    %115 = vmatpush1.msra.mxu0 %v70
    %116 = vmatprep.subr.mxu0 %v73
    %117 = vmatpush1.msra.mxu0 %v72
    %118 = vmatprep.subr.mxu0 %v75
    %119 = vmatpush1.msra.mxu0 %v74
    %120 = vmatprep.subr.mxu0 %v77
    %121 = vmatpush1.msra.mxu0 %v76
    %122 = vmatprep.subr.mxu0 %v79
    %123 = vmatpush1.msra.mxu0 %v78
    %124 = vmatprep.subr.mxu0 %v81
    %125 = vmatpush1.msra.mxu0 %v80
    %126 = vmatprep.subr.mxu0 %v83
    %127 = vmatpush1.msra.mxu0 %v82
    %128 = vmatprep.subr.mxu0 %v85
    %129 = vmatpush1.msra.mxu0 %v84
    %130 = vmatprep.subr.mxu0 %v87
    %131 = vmatpush1.msra.mxu0 %v86
    %132 = vmatprep.subr.mxu0 %v89
    %133 = vmatpush1.msra.mxu0 %v88
    %134 = vmatprep.subr.mxu0 %v91
    %135 = vmatpush1.msra.mxu0 %v90
    %136 = vmatprep.subr.mxu0 %v93
    %137 = vmatpush1.msra.mxu0 %v92
    %138 = vmatprep.subr.mxu0 %v95
    %139 = vmatpush1.msra.mxu0 %v94
    %140 = vmatprep.subr.mxu0 0.0
    %141 = vmatpush1.msra.mxu0 0.0
    %142 = vmatprep.subr.mxu0 0.0
    %143 = vmatpush1.msra.mxu0 0.0
    %144 = vmatprep.subr.mxu0 0.0
    %145 = vmatpush1.msra.mxu0 0.0
    %146 = vmatprep.subr.mxu0 0.0
    %147 = vmatpush1.msra.mxu0 0.0
    %148 = vmatprep.subr.mxu0 0.0
    %149 = vmatpush1.msra.mxu0 0.0
    %150 = vmatprep.subr.mxu0 0.0
    %151 = vmatpush1.msra.mxu0 0.0
    %152 = vmatprep.subr.mxu0 0.0
    %153 = vmatpush1.msra.mxu0 0.0
    %154 = vmatprep.subr.mxu0 0.0
    %155 = vmatpush1.msra.mxu0 0.0
    %156 = vmatprep.subr.mxu0 0.0
    %157 = vmatpush1.msra.mxu0 0.0
    %158 = vmatprep.subr.mxu0 0.0
    %159 = vmatpush1.msra.mxu0 0.0
    %160 = vmatprep.subr.mxu0 0.0
    %161 = vmatpush1.msra.mxu0 0.0
    %162 = vmatprep.subr.mxu0 0.0
    %163 = vmatpush1.msra.mxu0 0.0
    %164 = vmatprep.subr.mxu0 0.0
    %165 = vmatpush1.msra.mxu0 0.0
    %166 = vmatprep.subr.mxu0 0.0
    %167 = vmatpush1.msra.mxu0 0.0
    %168 = vmatprep.subr.mxu0 0.0
    %169 = vmatpush1.msra.mxu0 0.0
    %170 = vmatprep.subr.mxu0 0.0
    %171 = vmatpush1.msra.mxu0 0.0
    %172 = vmatprep.mubr.f32.mxu0 0.0
    %173 = vmatmul.mubr.f32.gmra.mrb[0].mxu0 %v62
    %v174 = vpop.f32.mrb[0].mxu0
    %v175 = vadd.f32 %v101, %v174
    %v176 = vpop.f32.mrb[0].mxu0
    %v177 = vadd.f32 %v105, %v176
    %178 = vmatprep.mubr.f32.mxu0 0.0
    %179 = vmatmul.mubr.f32.gmra.mrb[0].mxu0 %v63
    %v180 = vpop.f32.mrb[0].mxu0
    %v181 = vadd.f32 %v101, %v180
    %v182 = vpop.f32.mrb[0].mxu0
    %v183 = vadd.f32 %v105, %v182
    %184 = vdwg.mxu0
    %v185 = vmax.f32 %v175, 0.0
    %v186 = vmax.f32 %v177, 0.0
    %v187 = vmax.f32 %v181, 0.0
    %v188 = vmax.f32 %v183, 0.0
    %v189 = vld [vmem:[#allocation7] sm:$0xff]
    %v190 = vld [vmem:[#allocation7 + $0x8] sm:$0xff]
    %v191 = vld [vmem:[#allocation7 + $0x10] sm:$0xff]
    %v192 = vld [vmem:[#allocation7 + $0x18] sm:$0xff]
    %v193 = vld [vmem:[#allocation7 + $0x20] sm:$0xff]
    %v194 = vld [vmem:[#allocation7 + $0x28] sm:$0xff]
    %v195 = vld [vmem:[#allocation7 + $0x30] sm:$0xff]
    %v196 = vld [vmem:[#allocation7 + $0x38] sm:$0xff]
    %v197 = vld [vmem:[#allocation7 + $0x40] sm:$0xff]
    %v198 = vld [vmem:[#allocation7 + $0x48] sm:$0xff]
    %v199 = vld [vmem:[#allocation7 + $0x50] sm:$0xff]
    %v200 = vld [vmem:[#allocation7 + $0x58] sm:$0xff]
    %v201 = vld [vmem:[#allocation7 + $0x60] sm:$0xff]
    %v202 = vld [vmem:[#allocation7 + $0x68] sm:$0xff]
    %v203 = vld [vmem:[#allocation7 + $0x70] sm:$0xff]
    %v204 = vld [vmem:[#allocation7 + $0x78] sm:$0xff]
    %v205 = vld [vmem:[#allocation7 + $0x80] sm:$0xff]
    %v206 = vld [vmem:[#allocation7 + $0x88] sm:$0xff]
    %v207 = vld [vmem:[#allocation7 + $0x90] sm:$0xff]
    %v208 = vld [vmem:[#allocation7 + $0x98] sm:$0xff]
    %v209 = vld [vmem:[#allocation7 + $0xa0] sm:$0xff]
    %v210 = vld [vmem:[#allocation7 + $0xa8] sm:$0xff]
    %v211 = vld [vmem:[#allocation7 + $0xb0] sm:$0xff]
    %v212 = vld [vmem:[#allocation7 + $0xb8] sm:$0xff]
    %v213 = vld [vmem:[#allocation7 + $0xc0] sm:$0xff]
    %v214 = vld [vmem:[#allocation7 + $0xc8] sm:$0xff]
    %v215 = vld [vmem:[#allocation7 + $0xd0] sm:$0xff]
    %v216 = vld [vmem:[#allocation7 + $0xd8] sm:$0xff]
    %v217 = vld [vmem:[#allocation7 + $0xe0] sm:$0xff]
    %v218 = vld [vmem:[#allocation7 + $0xe8] sm:$0xff]
    %v219 = vld [vmem:[#allocation7 + $0xf0] sm:$0xff]
    %v220 = vld [vmem:[#allocation7 + $0xf8] sm:$0xff]
    %v221 = vld [vmem:[%s4] sm:$0x1]
    %v223 = vlaneseq
    %v224 = vshrl.u32 %v223, 7
    %v225 = vsub.s32 0, %v224
    %v226 = vrot.slane %v221, %v225
    %228 = vmatprep.subr.mxu0 0.0
    %229 = vmatpush1.msra.mxu0 %v189
    %230 = vmatprep.subr.mxu0 0.0
    %231 = vmatpush1.msra.mxu0 %v190
    %232 = vmatprep.subr.mxu0 0.0
    %233 = vmatpush1.msra.mxu0 %v191
    %234 = vmatprep.subr.mxu0 0.0
    %235 = vmatpush1.msra.mxu0 %v192
    %236 = vmatprep.subr.mxu0 0.0
    %237 = vmatpush1.msra.mxu0 %v193
    %238 = vmatprep.subr.mxu0 0.0
    %239 = vmatpush1.msra.mxu0 %v194
    %240 = vmatprep.subr.mxu0 0.0
    %241 = vmatpush1.msra.mxu0 %v195
    %242 = vmatprep.subr.mxu0 0.0
    %243 = vmatpush1.msra.mxu0 %v196
    %244 = vmatprep.subr.mxu0 0.0
    %245 = vmatpush1.msra.mxu0 %v197
    %246 = vmatprep.subr.mxu0 0.0
    %247 = vmatpush1.msra.mxu0 %v198
    %248 = vmatprep.subr.mxu0 0.0
    %249 = vmatpush1.msra.mxu0 %v199
    %250 = vmatprep.subr.mxu0 0.0
    %251 = vmatpush1.msra.mxu0 %v200
    %252 = vmatprep.subr.mxu0 0.0
    %253 = vmatpush1.msra.mxu0 %v201
    %254 = vmatprep.subr.mxu0 0.0
    %255 = vmatpush1.msra.mxu0 %v202
    %256 = vmatprep.subr.mxu0 0.0
    %257 = vmatpush1.msra.mxu0 %v203
    %258 = vmatprep.subr.mxu0 0.0
    %259 = vmatpush1.msra.mxu0 %v204
    %260 = vmatprep.subr.mxu0 0.0
    %261 = vmatpush1.msra.mxu0 %v205
    %262 = vmatprep.subr.mxu0 0.0
    %263 = vmatpush1.msra.mxu0 %v206
    %264 = vmatprep.subr.mxu0 0.0
    %265 = vmatpush1.msra.mxu0 %v207
    %266 = vmatprep.subr.mxu0 0.0
    %267 = vmatpush1.msra.mxu0 %v208
    %268 = vmatprep.subr.mxu0 0.0
    %269 = vmatpush1.msra.mxu0 %v209
    %270 = vmatprep.subr.mxu0 0.0
    %271 = vmatpush1.msra.mxu0 %v210
    %272 = vmatprep.subr.mxu0 0.0
    %273 = vmatpush1.msra.mxu0 %v211
    %274 = vmatprep.subr.mxu0 0.0
    %275 = vmatpush1.msra.mxu0 %v212
    %276 = vmatprep.subr.mxu0 0.0
    %277 = vmatpush1.msra.mxu0 %v213
    %278 = vmatprep.subr.mxu0 0.0
    %279 = vmatpush1.msra.mxu0 %v214
    %280 = vmatprep.subr.mxu0 0.0
    %281 = vmatpush1.msra.mxu0 %v215
    %282 = vmatprep.subr.mxu0 0.0
    %283 = vmatpush1.msra.mxu0 %v216
    %284 = vmatprep.subr.mxu0 0.0
    %285 = vmatpush1.msra.mxu0 %v217
    %286 = vmatprep.subr.mxu0 0.0
    %287 = vmatpush1.msra.mxu0 %v218
    %288 = vmatprep.subr.mxu0 0.0
    %289 = vmatpush1.msra.mxu0 %v219
    %290 = vmatprep.subr.mxu0 0.0
    %291 = vmatpush1.msra.mxu0 %v220
    %292 = vmatprep.mubr.f32.mxu0 %v186
    %293 = vmatmul.mubr.f32.gmra.mrb[0].mxu0 %v185
    %v294 = vpop.f32.mrb[0].mxu0
    %v295 = vadd.f32 %v226, %v294
    %v296 = vpop.f32.mrb[0].mxu0
    %297 = vmatprep.mubr.f32.mxu0 %v188
    %298 = vmatmul.mubr.f32.gmra.mrb[0].mxu0 %v187
    %v299 = vpop.f32.mrb[0].mxu0
    %v300 = vadd.f32 %v226, %v299
    %v301 = vpop.f32.mrb[0].mxu0
    %302 = vdwg.mxu0
    %303 = vst [vmem:[#allocation8] sm:$0xff] %v295
    %304 = vst [vmem:[#allocation8 + $0x8] sm:$0xff] %v300
    // Predicated region
    $region34: #{mlp_forward.1} parent=1 // pred_check
      _
    $region35: #{mlp_forward.1} parent=1 // pred_check_branch
      %306 = sbr.rel (0) target = $region37
    $region36: #{mlp_forward.1} parent=1 // pred_region
      %s308 = ssub.s32 256, 256
      %309 = vsyncadd [#allocation4], %s308
      %s310 = sshll.u32 [#allocation8], 4
      %s311 = int_to_ptr.vmem [resolvable:$true] %s310
      %316 = dma.vmem_to_hbm [thread:$0]  %s311, 256, %s5, [#allocation4], 128, 128, 8
    $region37: #{mlp_forward.1} parent=1 // pred_fallthru
      _
    // Predicated region
    $region38: #{mlp_forward.1} parent=1 // pred_check
      _
    $region39: #{mlp_forward.1} parent=1 // pred_check_branch
      %318 = sbr.rel (0) target = $region41
    $region40: #{mlp_forward.1} parent=1 // pred_region
      %319 = dma.done [#allocation4], 256
    $region41: #{mlp_forward.1} parent=1 // pred_fallthru
      _
    %320 = vsyncpa [#allocation3], 1
    %321 = vsyncpa [#allocation6], 1
    %322 = vsyncpa [#allocation4], 1

</llo_original>
